<compile_context>
chip_gen: v5e
topology: v5e:2x2
jax: 0.10.0
libtpu: 0.0.40
codegen_flags: <defaults>
</compile_context>

<pallas_src>
import functools

import jax
import jax.numpy as jnp
from jax.experimental import pallas as pl
from jax.experimental.pallas import tpu as pltpu

_FC1 = 64
_HEAD = 256


def _round_up(x, m):
    return (x + m - 1) // m * m


def _evaluate_kernel(xa_ref, w1_ref, b1_ref, wh_ref, bh_ref, wo_ref, bo_ref,
                     out_ref, *, state_dim, action_dim, out_lanes):
    cd = wh_ref.dtype  # dtype fed to the MXU (bf16 or f32); accumulation is f32

    xa = xa_ref[...]                                               # (T, S+1)

    # fc1 + ReLU.  w1 carries an all-zero row for the appended action column,
    # so the full augmented input goes straight to the MXU (no LHS slicing).
    h = jnp.dot(xa, w1_ref[...], preferred_element_type=jnp.float32) + b1_ref[...]
    h = jnp.maximum(h, 0.0)                                        # (T, 64)

    # Fused actor|critic first linears: one (64, 512) GEMM + ReLU.
    y = jnp.dot(h.astype(cd), wh_ref[...],
                preferred_element_type=jnp.float32) + bh_ref[...]
    y = jnp.maximum(y, 0.0)                                        # (T, 512)

    # Fused output projection: block-diagonal (512, A+1) GEMM.
    z = jnp.dot(y.astype(cd), wo_ref[...],
                preferred_element_type=jnp.float32) + bo_ref[...]  # (T, A+1)
    logits = z[:, :action_dim]                                     # (T, A)
    value = z[:, action_dim:action_dim + 1]                        # (T, 1)

    # Numerically stable softmax / log-softmax (single exp pass, f32 math).
    m = jnp.max(logits, axis=-1, keepdims=True)
    shifted = logits - m
    e = jnp.exp(shifted)
    denom = jnp.sum(e, axis=-1, keepdims=True)
    probs = e / denom                         # exact divide (keeps 1e-5 in f32)
    log_probs = shifted - jnp.log(denom)

    # Categorical log_prob(action) via one-hot gather, and entropy.
    t, a = probs.shape
    act = xa[:, state_dim:state_dim + 1].astype(jnp.int32)         # (T, 1)
    col = jax.lax.broadcasted_iota(jnp.int32, (t, a), 1)
    onehot = (col == act).astype(jnp.float32)
    logp = jnp.sum(log_probs * onehot, axis=-1, keepdims=True)     # (T, 1)
    ent = -jnp.sum(probs * log_probs, axis=-1, keepdims=True)      # (T, 1)

    # Pack into one dense (T, out_lanes) f32 slab:
    #   lanes [0:A] probs, lane A logp, lane A+1 value, lane A+2 entropy.
    pieces = [probs, logp, value, ent]
    pad_w = out_lanes - (action_dim + 3)
    if pad_w > 0:
        pieces.append(jnp.zeros((t, pad_w), jnp.float32))
    out_ref[...] = jnp.concatenate(pieces, axis=-1)


def _fuse_params(params, compute_dtype):
    """One-time fusion of the per-head weights into wide / block-diag GEMMs."""
    a_dim = params["wa2"].shape[1]
    s_dim = params["w1"].shape[0]
    # fc1 weight gains one zero input row so the merged action column is inert.
    w1 = jnp.zeros((s_dim + 1, _FC1), jnp.float32).at[:s_dim].set(params["w1"])
    b1 = params["b1"].astype(jnp.float32)
    w_heads = jnp.concatenate([params["wa1"], params["wc1"]], axis=1)   # (64, 512)
    b_heads = jnp.concatenate([params["ba1"], params["bc1"]], axis=1)   # (1, 512)
    w_out = jnp.zeros((2 * _HEAD, a_dim + 1), jnp.float32)
    w_out = w_out.at[:_HEAD, :a_dim].set(params["wa2"])
    w_out = w_out.at[_HEAD:, a_dim:].set(params["wc2"])                 # (512, A+1)
    b_out = jnp.concatenate([params["ba2"], params["bc2"]], axis=1)     # (1, A+1)
    return (w1.astype(compute_dtype), b1,
            w_heads.astype(compute_dtype), b_heads.astype(jnp.float32),
            w_out.astype(compute_dtype), b_out.astype(jnp.float32),
            a_dim)


def init_params(state_dim, action_dim, key):
    """Deterministic init mimicking nn.Linear's U(-1/sqrt(fan_in), 1/sqrt(fan_in))."""
    def linear(key, fan_in, fan_out):
        kw, kb = jax.random.split(key)
        bound = 1.0 / jnp.sqrt(jnp.float32(fan_in))
        w = jax.random.uniform(kw, (fan_in, fan_out), jnp.float32, -bound, bound)
        b = jax.random.uniform(kb, (1, fan_out), jnp.float32, -bound, bound)
        return w, b

    keys = jax.random.split(key, 5)
    w1, b1 = linear(keys[0], state_dim, _FC1)
    wa1, ba1 = linear(keys[1], _FC1, _HEAD)
    wa2, ba2 = linear(keys[2], _HEAD, action_dim)
    wc1, bc1 = linear(keys[3], _FC1, _HEAD)
    wc2, bc2 = linear(keys[4], _HEAD, 1)
    return dict(w1=w1, b1=b1, wa1=wa1, ba1=ba1, wa2=wa2, ba2=ba2,
                wc1=wc1, bc1=bc1, wc2=wc2, bc2=bc2)


def evaluate(params, state, action, *, tile_b_max=1024, compute_dtype=jnp.bfloat16):
    """Pallas equivalent of BaselineActorCriticPPO.evaluate(state, action).

    Returns (action_logprobs (B,), state_value (B,), entropy (B,), action_probs (B, A)).
    Default compute_dtype is bf16 (MXU operands only); pass jnp.float32 for
    exact-tolerance testing.  tile_b_max bounds the per-step batch tile; VMEM
    use at 1024 rows is < 8 MiB, safe on v5e/v6e/v7x scoped defaults.
    """
    b, s = state.shape
    w1, b1, wh, bh, wo, bo, a_dim = _fuse_params(params, compute_dtype)
    out_lanes = _round_up(a_dim + 3, 8)      # narrow, dense output slab

    if compute_dtype == jnp.bfloat16:
        # Action ids ride along as a bf16 column; exact for ids < 256.
        assert a_dim <= 256, "bf16 action column requires action_dim <= 256"

    # Batch tiling: multiple of 16 for bf16 (clean sublane packing), 8 for f32.
    mult = 16 if compute_dtype == jnp.bfloat16 else 8
    b_ceil = _round_up(b, mult)
    tile_b = min(_round_up(int(tile_b_max), mult), b_ceil)
    # Keep >= 2 'parallel' grid steps when the batch allows it: v7x shards the
    # parallel axis across its 2 TensorCores (a 1-step grid idles one); the
    # extra step costs only ~0.35us on single-TC v5e/v6e.
    if b_ceil // tile_b < 2 and b_ceil >= 2 * mult:
        tile_b = _round_up(pl.cdiv(b_ceil, 2), mult)
    b_pad = _round_up(b, tile_b)

    # Build the augmented (b_pad, S+1) input in one fused pass: cast to the
    # compute dtype, append the action ids as an extra column (fc1 has a
    # matching zero input row) and zero-pad ragged tail rows.  This is the one
    # copy already required for the bf16 cast -- no standalone pad pass.
    xa = jnp.concatenate(
        [state.astype(compute_dtype),
         action.reshape(b, 1).astype(compute_dtype)], axis=1)
    if b_pad > b:
        xa = jnp.pad(xa, ((0, b_pad - b), (0, 0)))

    batched = lambda i: (i, 0)   # state+action / output tiles follow the grid
    resident = lambda i: (0, 0)  # weights & biases stay in VMEM across the grid

    kernel = functools.partial(_evaluate_kernel, state_dim=s,
                               action_dim=a_dim, out_lanes=out_lanes)

    flops = 2 * b_pad * ((s + 1) * _FC1 + _FC1 * 2 * _HEAD + 2 * _HEAD * (a_dim + 1))
    bytes_accessed = (int(xa.size) * xa.dtype.itemsize
                      + sum(int(x.size) * x.dtype.itemsize
                            for x in (w1, b1, wh, bh, wo, bo))
                      + b_pad * out_lanes * 4)
    cost = pl.CostEstimate(flops=int(flops),
                           transcendentals=int(b_pad * (a_dim + 1)),
                           bytes_accessed=int(bytes_accessed))

    out = pl.pallas_call(
        kernel,
        out_shape=jax.ShapeDtypeStruct((b_pad, out_lanes), jnp.float32),
        grid=(b_pad // tile_b,),
        in_specs=[
            pl.BlockSpec((tile_b, s + 1), batched),  # state | action column
            pl.BlockSpec(w1.shape, resident),
            pl.BlockSpec(b1.shape, resident),
            pl.BlockSpec(wh.shape, resident),
            pl.BlockSpec(bh.shape, resident),
            pl.BlockSpec(wo.shape, resident),
            pl.BlockSpec(bo.shape, resident),
        ],
        out_specs=pl.BlockSpec((tile_b, out_lanes), batched),
        compiler_params=pltpu.CompilerParams(
            dimension_semantics=("parallel",)),
        cost_estimate=cost,
    )(xa, w1, b1, wh, bh, wo, bo)

    probs = out[:b, :a_dim]
    logp = out[:b, a_dim]
    value = out[:b, a_dim + 1]
    ent = out[:b, a_dim + 2]
    return logp, value, ent, probs


def evaluate_ref(params, state, action):
    """Pure-JAX reference for correctness checking (matches the PyTorch module)."""
    sf = jax.nn.relu(state @ params["w1"] + params["b1"])
    a1 = jax.nn.relu(sf @ params["wa1"] + params["ba1"])
    logits = a1 @ params["wa2"] + params["ba2"]
    probs = jax.nn.softmax(logits, axis=-1)
    logp_all = jax.nn.log_softmax(logits, axis=-1)
    logp = jnp.take_along_axis(logp_all, action[:, None].astype(jnp.int32), axis=-1)[:, 0]
    ent = -jnp.sum(probs * logp_all, axis=-1)
    c1 = jax.nn.relu(sf @ params["wc1"] + params["bc1"])
    value = (c1 @ params["wc2"] + params["bc2"])[:, 0]
    return logp, value, ent, probs


if __name__ == "__main__":
    B, STATE_DIM, ACTION_DIM = 8, 8, 6

    key = jax.random.PRNGKey(0)
    k_params, k_state, k_act = jax.random.split(key, 3)
    params = init_params(STATE_DIM, ACTION_DIM, k_params)

    # Case 1: tiny batch, exact f32 path (tight tolerance), single tile.
    state = jax.random.normal(k_state, (B, STATE_DIM), jnp.float32)
    action = jax.random.randint(k_act, (B,), 0, ACTION_DIM, jnp.int32)
    outs = evaluate(params, state, action, compute_dtype=jnp.float32)
    jax.block_until_ready(outs)
    refs = evaluate_ref(params, state, action)
    for o, r, name in zip(outs, refs, ("log_prob", "value", "entropy", "probs")):
        assert jnp.allclose(o, r, atol=1e-5), f"{name} mismatch (f32 single tile)"

    # Case 2: default bf16 compute, batch not a multiple of the tile, small
    # tile cap so the 1-D grid really iterates (padding + weight residency).
    B2 = 40
    state2 = jax.random.normal(jax.random.PRNGKey(1), (B2, STATE_DIM), jnp.float32)
    action2 = jax.random.randint(jax.random.PRNGKey(2), (B2,), 0, ACTION_DIM, jnp.int32)
    outs2 = evaluate(params, state2, action2, tile_b_max=16)
    jax.block_until_ready(outs2)
    refs2 = evaluate_ref(params, state2, action2)
    for o, r, name in zip(outs2, refs2, ("log_prob", "value", "entropy", "probs")):
        assert jnp.allclose(o, r, atol=5e-2, rtol=5e-2), f"{name} mismatch (bf16 tiled)"

    print("KERNEL_OK")
</pallas_src>

<mosaic_0001>
module attributes {stable_mosaic.version = 11 : i64} {
  func.func @_evaluate_kernel(%arg0: i32, %arg1: memref<8x9xf32, #tpu.memory_space<vmem>>, %arg2: memref<9x64xf32, #tpu.memory_space<vmem>>, %arg3: memref<1x64xf32, #tpu.memory_space<vmem>>, %arg4: memref<64x512xf32, #tpu.memory_space<vmem>>, %arg5: memref<1x512xf32, #tpu.memory_space<vmem>>, %arg6: memref<512x7xf32, #tpu.memory_space<vmem>>, %arg7: memref<1x7xf32, #tpu.memory_space<vmem>>, %arg8: memref<8x16xf32, #tpu.memory_space<vmem>>) attributes {dimension_semantics = [#tpu.dimension_semantics<parallel>], iteration_bounds = array<i64: 1>, scalar_prefetch = 0 : i64, scratch_operands = 0 : i64, tpu.core_type = #tpu.core_type<tc>, window_params = [{transform_indices = @transform_0, window_bounds = array<i64: 8, 9>}, {pipeline_mode = #tpu.pipeline_mode<synchronous>, transform_indices = @transform_1, window_bounds = array<i64: 9, 64>}, {pipeline_mode = #tpu.pipeline_mode<synchronous>, transform_indices = @transform_2, window_bounds = array<i64: 1, 64>}, {pipeline_mode = #tpu.pipeline_mode<synchronous>, transform_indices = @transform_3, window_bounds = array<i64: 64, 512>}, {pipeline_mode = #tpu.pipeline_mode<synchronous>, transform_indices = @transform_4, window_bounds = array<i64: 1, 512>}, {pipeline_mode = #tpu.pipeline_mode<synchronous>, transform_indices = @transform_5, window_bounds = array<i64: 512, 7>}, {pipeline_mode = #tpu.pipeline_mode<synchronous>, transform_indices = @transform_6, window_bounds = array<i64: 1, 7>}, {transform_indices = @transform_7, window_bounds = array<i64: 8, 16>}]} {
    %c0 = arith.constant 0 : index
    %c0_0 = arith.constant 0 : index
    %0 = vector.load %arg1[%c0, %c0_0] : memref<8x9xf32, #tpu.memory_space<vmem>>, vector<8x9xf32>
    %c0_1 = arith.constant 0 : index
    %c0_2 = arith.constant 0 : index
    %1 = vector.load %arg2[%c0_1, %c0_2] : memref<9x64xf32, #tpu.memory_space<vmem>>, vector<9x64xf32>
    %cst = arith.constant dense<0.000000e+00> : vector<8x64xf32>
    %2 = tpu.matmul %0, %1, %cst {dimension_numbers = #tpu.dot_dimension_numbers<[1], [0], [0], [1], [0, 0, 1, 1], [], []>} : vector<8x9xf32>, vector<9x64xf32>, vector<8x64xf32> -> vector<8x64xf32>
    %c0_3 = arith.constant 0 : index
    %c0_4 = arith.constant 0 : index
    %3 = vector.load %arg3[%c0_3, %c0_4] : memref<1x64xf32, #tpu.memory_space<vmem>>, vector<1x64xf32>
    %4 = vector.broadcast %3 : vector<1x64xf32> to vector<8x64xf32>
    %5 = arith.addf %2, %4 : vector<8x64xf32>
    %cst_5 = arith.constant 0.000000e+00 : f32
    %6 = vector.broadcast %cst_5 : f32 to vector<8x64xf32>
    %7 = arith.maximumf %5, %6 : vector<8x64xf32>
    %c0_6 = arith.constant 0 : index
    %c0_7 = arith.constant 0 : index
    %8 = vector.load %arg4[%c0_6, %c0_7] : memref<64x512xf32, #tpu.memory_space<vmem>>, vector<64x512xf32>
    %cst_8 = arith.constant dense<0.000000e+00> : vector<8x512xf32>
    %9 = tpu.matmul %7, %8, %cst_8 {dimension_numbers = #tpu.dot_dimension_numbers<[1], [0], [0], [1], [0, 0, 1, 1], [], []>} : vector<8x64xf32>, vector<64x512xf32>, vector<8x512xf32> -> vector<8x512xf32>
    %c0_9 = arith.constant 0 : index
    %c0_10 = arith.constant 0 : index
    %10 = vector.load %arg5[%c0_9, %c0_10] : memref<1x512xf32, #tpu.memory_space<vmem>>, vector<1x512xf32>
    %11 = vector.broadcast %10 : vector<1x512xf32> to vector<8x512xf32>
    %12 = arith.addf %9, %11 : vector<8x512xf32>
    %cst_11 = arith.constant 0.000000e+00 : f32
    %13 = vector.broadcast %cst_11 : f32 to vector<8x512xf32>
    %14 = arith.maximumf %12, %13 : vector<8x512xf32>
    %c0_12 = arith.constant 0 : index
    %c0_13 = arith.constant 0 : index
    %15 = vector.load %arg6[%c0_12, %c0_13] : memref<512x7xf32, #tpu.memory_space<vmem>>, vector<512x7xf32>
    %cst_14 = arith.constant dense<0.000000e+00> : vector<8x7xf32>
    %16 = tpu.matmul %14, %15, %cst_14 {dimension_numbers = #tpu.dot_dimension_numbers<[1], [0], [0], [1], [0, 0, 1, 1], [], []>} : vector<8x512xf32>, vector<512x7xf32>, vector<8x7xf32> -> vector<8x7xf32>
    %c0_15 = arith.constant 0 : index
    %c0_16 = arith.constant 0 : index
    %17 = vector.load %arg7[%c0_15, %c0_16] : memref<1x7xf32, #tpu.memory_space<vmem>>, vector<1x7xf32>
    %18 = vector.broadcast %17 : vector<1x7xf32> to vector<8x7xf32>
    %19 = arith.addf %16, %18 : vector<8x7xf32>
    %20 = vector.extract_strided_slice %19 {offsets = [0, 0], sizes = [8, 6], strides = [1, 1]} : vector<8x7xf32> to vector<8x6xf32>
    %21 = vector.extract_strided_slice %19 {offsets = [0, 6], sizes = [8, 1], strides = [1, 1]} : vector<8x7xf32> to vector<8x1xf32>
    %cst_17 = arith.constant dense<0xFF800000> : vector<8xf32>
    %22 = vector.multi_reduction <maximumf>, %20, %cst_17 [1] : vector<8x6xf32> to vector<8xf32>
    %23 = vector.shape_cast %22 : vector<8xf32> to vector<8x1xf32>
    %24 = vector.broadcast %23 : vector<8x1xf32> to vector<8x6xf32>
    %25 = arith.subf %20, %24 : vector<8x6xf32>
    %26 = math.exp %25 : vector<8x6xf32>
    %cst_18 = arith.constant dense<0.000000e+00> : vector<8xf32>
    %27 = vector.multi_reduction <add>, %26, %cst_18 [1] : vector<8x6xf32> to vector<8xf32>
    %28 = vector.shape_cast %27 : vector<8xf32> to vector<8x1xf32>
    %29 = vector.broadcast %28 : vector<8x1xf32> to vector<8x6xf32>
    %30 = arith.divf %26, %29 : vector<8x6xf32>
    %31 = math.log %28 : vector<8x1xf32>
    %32 = vector.broadcast %31 : vector<8x1xf32> to vector<8x6xf32>
    %33 = arith.subf %25, %32 : vector<8x6xf32>
    %34 = vector.extract_strided_slice %0 {offsets = [0, 8], sizes = [8, 1], strides = [1, 1]} : vector<8x9xf32> to vector<8x1xf32>
    %35 = arith.fptosi %34 : vector<8x1xf32> to vector<8x1xi32>
    %36 = tpu.iota {dimensions = array<i32: 1>} : vector<8x6xi32>
    %37 = vector.broadcast %35 : vector<8x1xi32> to vector<8x6xi32>
    %38 = arith.cmpi eq, %36, %37 : vector<8x6xi32>
    %39 = arith.extui %38 : vector<8x6xi1> to vector<8x6xi32>
    %40 = arith.sitofp %39 : vector<8x6xi32> to vector<8x6xf32>
    %41 = arith.mulf %33, %40 : vector<8x6xf32>
    %cst_19 = arith.constant dense<0.000000e+00> : vector<8xf32>
    %42 = vector.multi_reduction <add>, %41, %cst_19 [1] : vector<8x6xf32> to vector<8xf32>
    %43 = vector.shape_cast %42 : vector<8xf32> to vector<8x1xf32>
    %44 = arith.mulf %30, %33 : vector<8x6xf32>
    %cst_20 = arith.constant dense<0.000000e+00> : vector<8xf32>
    %45 = vector.multi_reduction <add>, %44, %cst_20 [1] : vector<8x6xf32> to vector<8xf32>
    %46 = vector.shape_cast %45 : vector<8xf32> to vector<8x1xf32>
    %cst_21 = arith.constant 0.000000e+00 : f32
    %47 = vector.broadcast %cst_21 : f32 to vector<8x1xf32>
    %48 = arith.subf %47, %46 : vector<8x1xf32>
    %cst_22 = arith.constant 0.000000e+00 : f32
    %49 = vector.broadcast %cst_22 : f32 to vector<8x7xf32>
    %50 = tpu.concatenate %30, %43, %21, %48, %49 in 1 : vector<8x6xf32>, vector<8x1xf32>, vector<8x1xf32>, vector<8x1xf32>, vector<8x7xf32> -> vector<8x16xf32>
    %c0_23 = arith.constant 0 : index
    %c0_24 = arith.constant 0 : index
    %51 = vector.load %arg8[%c0_23, %c0_24] : memref<8x16xf32, #tpu.memory_space<vmem>>, vector<8x16xf32>
    tpu.vector_store %arg8[%c0_23, %c0_24], %50 {strides = array<i32>} : memref<8x16xf32, #tpu.memory_space<vmem>>, vector<8x16xf32>,
    return
  }
  func.func @transform_0(%arg0: i32) -> (i32, i32) {
    %c0_i32 = arith.constant 0 : i32
    %c0_i32_0 = arith.constant 0 : i32
    return %arg0, %c0_i32 : i32, i32
  }
  func.func @transform_1(%arg0: i32) -> (i32, i32) {
    %c0_i32 = arith.constant 0 : i32
    %c0_i32_0 = arith.constant 0 : i32
    %c0_i32_1 = arith.constant 0 : i32
    return %c0_i32, %c0_i32_0 : i32, i32
  }
  func.func @transform_2(%arg0: i32) -> (i32, i32) {
    %c0_i32 = arith.constant 0 : i32
    %c0_i32_0 = arith.constant 0 : i32
    %c0_i32_1 = arith.constant 0 : i32
    return %c0_i32, %c0_i32_0 : i32, i32
  }
  func.func @transform_3(%arg0: i32) -> (i32, i32) {
    %c0_i32 = arith.constant 0 : i32
    %c0_i32_0 = arith.constant 0 : i32
    %c0_i32_1 = arith.constant 0 : i32
    return %c0_i32, %c0_i32_0 : i32, i32
  }
  func.func @transform_4(%arg0: i32) -> (i32, i32) {
    %c0_i32 = arith.constant 0 : i32
    %c0_i32_0 = arith.constant 0 : i32
    %c0_i32_1 = arith.constant 0 : i32
    return %c0_i32, %c0_i32_0 : i32, i32
  }
  func.func @transform_5(%arg0: i32) -> (i32, i32) {
    %c0_i32 = arith.constant 0 : i32
    %c0_i32_0 = arith.constant 0 : i32
    %c0_i32_1 = arith.constant 0 : i32
    return %c0_i32, %c0_i32_0 : i32, i32
  }
  func.func @transform_6(%arg0: i32) -> (i32, i32) {
    %c0_i32 = arith.constant 0 : i32
    %c0_i32_0 = arith.constant 0 : i32
    %c0_i32_1 = arith.constant 0 : i32
    return %c0_i32, %c0_i32_0 : i32, i32
  }
  func.func @transform_7(%arg0: i32) -> (i32, i32) {
    %c0_i32 = arith.constant 0 : i32
    %c0_i32_0 = arith.constant 0 : i32
    return %arg0, %c0_i32 : i32, i32
  }
}

</mosaic_0001>

<llo_original>
// kernel: tpu_custom_call.1
$region0: #{tpu_custom_call.1}
  #allocation0 [shape = 'u32[]', space=smem, size = 0x4, offset = 0x4, fixed_abs, tag = 'smem constant byte address 0x4 - core index']
  #allocation1 [shape = 'u32[72,128]{1,0:T(1,128)}', space=vmem, size = 0x9000, scoped, tag = 'internal scratch']
  %s0 = inlined_call_operand.vmem [shape: f32[8,9], index: 0, kind: input, shape index: {}]
  %s1 = inlined_call_operand.vmem [shape: f32[9,64], index: 1, kind: input, shape index: {}]
  %s2 = inlined_call_operand.vmem [shape: f32[1,64], index: 2, kind: input, shape index: {}]
  %s3 = inlined_call_operand.vmem [shape: f32[64,512], index: 3, kind: input, shape index: {}]
  %s4 = inlined_call_operand.vmem [shape: f32[1,512], index: 4, kind: input, shape index: {}]
  %s5 = inlined_call_operand.vmem [shape: f32[512,7], index: 5, kind: input, shape index: {}]
  %s6 = inlined_call_operand.vmem [shape: f32[1,7], index: 6, kind: input, shape index: {}]
  %s7 = inlined_call_operand.hbm [shape: f32[8,16], index: 7, kind: output, shape index: {}]
  %s8 = sld [smem:[#allocation0]]
  $region38: #{tpu_custom_call.1} parent=0
    _
  %s10 = ssub.s32 1, %s8
  %s11 = scalar_select 0, %s10, %s8
  $region1: #{tpu_custom_call.1} parent=0
    #allocation2 [shape = 'u8[4096]{0}', space=vmem, size = 0x1000, scoped, tag = 'output window, operand 0, single buffered']
    #allocation3 [shape = 's32[1]{0}', space=sflag, size = 0x4, scoped, tag = 'scoped memory for tpu_custom_call.1']
    %12 = vsyncpa [#allocation3], 0
    // Predicated region
    $region2: #{tpu_custom_call.1} parent=1 // pred_check
      _
    $region3: #{tpu_custom_call.1} parent=1 // pred_check_branch
      %14 = sbr.rel (0) target = $region5
    $region4: #{tpu_custom_call.1} parent=1 // pred_region
      _
    $region5: #{tpu_custom_call.1} parent=1 // pred_fallthru
      _
    // Predicated region
    $region6: #{tpu_custom_call.1} parent=1 // pred_check
      _
    $region7: #{tpu_custom_call.1} parent=1 // pred_check_branch
      %16 = sbr.rel (0) target = $region9
    $region8: #{tpu_custom_call.1} parent=1 // pred_region
      _
    $region9: #{tpu_custom_call.1} parent=1 // pred_fallthru
      _
    // Predicated region
    $region10: #{tpu_custom_call.1} parent=1 // pred_check
      _
    $region11: #{tpu_custom_call.1} parent=1 // pred_check_branch
      %18 = sbr.rel (0) target = $region13
    $region12: #{tpu_custom_call.1} parent=1 // pred_region
      _
    $region13: #{tpu_custom_call.1} parent=1 // pred_fallthru
      _
    // Predicated region
    $region14: #{tpu_custom_call.1} parent=1 // pred_check
      _
    $region15: #{tpu_custom_call.1} parent=1 // pred_check_branch
      %20 = sbr.rel (0) target = $region17
    $region16: #{tpu_custom_call.1} parent=1 // pred_region
      _
    $region17: #{tpu_custom_call.1} parent=1 // pred_fallthru
      _
    // Predicated region
    $region18: #{tpu_custom_call.1} parent=1 // pred_check
      _
    $region19: #{tpu_custom_call.1} parent=1 // pred_check_branch
      %22 = sbr.rel (0) target = $region21
    $region20: #{tpu_custom_call.1} parent=1 // pred_region
      _
    $region21: #{tpu_custom_call.1} parent=1 // pred_fallthru
      _
    // Predicated region
    $region22: #{tpu_custom_call.1} parent=1 // pred_check
      _
    $region23: #{tpu_custom_call.1} parent=1 // pred_check_branch
      %24 = sbr.rel (0) target = $region25
    $region24: #{tpu_custom_call.1} parent=1 // pred_region
      _
    $region25: #{tpu_custom_call.1} parent=1 // pred_fallthru
      _
    // Predicated region
    $region26: #{tpu_custom_call.1} parent=1 // pred_check
      _
    $region27: #{tpu_custom_call.1} parent=1 // pred_check_branch
      %26 = sbr.rel (0) target = $region29
    $region28: #{tpu_custom_call.1} parent=1 // pred_region
      _
    $region29: #{tpu_custom_call.1} parent=1 // pred_fallthru
      _
    %v27 = vld [vmem:[%s0] sm:$0xff]
    %v28 = vld [vmem:[%s1] sm:$0xff]
    %v29 = vld [vmem:[%s1 + $0x8] sm:$0x1]
    %v30 = vld [vmem:[%s2] sm:$0x1]
    %v32 = vperm.slane %v30, 0
    %vm34 = vcmask 72704
    %v36 = vsel %vm34, %v27, 0
    %vm38 = vcmask 1040384
    %v40 = vsel %vm38, %v29, 0
    %42 = vmatpush.msra.mxu0 0.0
    %43 = vmatpush.msra.mxu0 0.0
    %44 = vmatpush.msra.mxu0 0.0
    %45 = vmatpush.msra.mxu0 0.0
    %46 = vmatpush.msra.mxu0 0.0
    %47 = vmatpush.msra.mxu0 0.0
    %48 = vmatpush.msra.mxu0 0.0
    %49 = vmatpush.msra.mxu0 0.0
    %50 = vmatpush.msra.mxu0 0.0
    %51 = vmatpush.msra.mxu0 0.0
    %52 = vmatpush.msra.mxu0 0.0
    %53 = vmatpush.msra.mxu0 0.0
    %54 = vmatpush.msra.mxu0 0.0
    %55 = vmatpush.msra.mxu0 0.0
    %56 = vmatpush.msra.mxu0 %v40
    %57 = vmatpush.msra.mxu0 %v28
    %58 = vmatmul.f32.gmra.mxu0 %v36
    %v59 = vpop.f32.mrf.mxu0
    %v60 = vadd.f32 %v32, %v59
    %61 = vdwg.mxu0
    %v62 = vmax.f32 %v60, 0.0
    %v63 = vld [vmem:[%s3] sm:$0xff]
    %v64 = vld [vmem:[%s3 + $0x8] sm:$0xff]
    %v65 = vld [vmem:[%s3 + $0x10] sm:$0xff]
    %v66 = vld [vmem:[%s3 + $0x18] sm:$0xff]
    %v67 = vld [vmem:[%s3 + $0x20] sm:$0xff]
    %v68 = vld [vmem:[%s3 + $0x28] sm:$0xff]
    %v69 = vld [vmem:[%s3 + $0x30] sm:$0xff]
    %v70 = vld [vmem:[%s3 + $0x38] sm:$0xff]
    %v71 = vld [vmem:[%s3 + $0x40] sm:$0xff]
    %v72 = vld [vmem:[%s3 + $0x48] sm:$0xff]
    %v73 = vld [vmem:[%s3 + $0x50] sm:$0xff]
    %v74 = vld [vmem:[%s3 + $0x58] sm:$0xff]
    %v75 = vld [vmem:[%s3 + $0x60] sm:$0xff]
    %v76 = vld [vmem:[%s3 + $0x68] sm:$0xff]
    %v77 = vld [vmem:[%s3 + $0x70] sm:$0xff]
    %v78 = vld [vmem:[%s3 + $0x78] sm:$0xff]
    %v79 = vld [vmem:[%s3 + $0x80] sm:$0xff]
    %v80 = vld [vmem:[%s3 + $0x88] sm:$0xff]
    %v81 = vld [vmem:[%s3 + $0x90] sm:$0xff]
    %v82 = vld [vmem:[%s3 + $0x98] sm:$0xff]
    %v83 = vld [vmem:[%s3 + $0xa0] sm:$0xff]
    %v84 = vld [vmem:[%s3 + $0xa8] sm:$0xff]
    %v85 = vld [vmem:[%s3 + $0xb0] sm:$0xff]
    %v86 = vld [vmem:[%s3 + $0xb8] sm:$0xff]
    %v87 = vld [vmem:[%s3 + $0xc0] sm:$0xff]
    %v88 = vld [vmem:[%s3 + $0xc8] sm:$0xff]
    %v89 = vld [vmem:[%s3 + $0xd0] sm:$0xff]
    %v90 = vld [vmem:[%s3 + $0xd8] sm:$0xff]
    %v91 = vld [vmem:[%s3 + $0xe0] sm:$0xff]
    %v92 = vld [vmem:[%s3 + $0xe8] sm:$0xff]
    %v93 = vld [vmem:[%s3 + $0xf0] sm:$0xff]
    %v94 = vld [vmem:[%s3 + $0xf8] sm:$0xff]
    %v95 = vld [vmem:[%s4] sm:$0xf]
    %v97 = vperm.slane %v95, 0
    %v98 = vperm.slane %v95, 1
    %v99 = vperm.slane %v95, 2
    %v100 = vperm.slane %v95, 3
    %vm105 = vcmask 523264
    %v107 = vsel %vm105, %v62, 0
    %109 = vmatpush.msra.mxu0 0.0
    %110 = vmatpush.msra.mxu0 0.0
    %111 = vmatpush.msra.mxu0 0.0
    %112 = vmatpush.msra.mxu0 0.0
    %113 = vmatpush.msra.mxu0 0.0
    %114 = vmatpush.msra.mxu0 0.0
    %115 = vmatpush.msra.mxu0 0.0
    %116 = vmatpush.msra.mxu0 0.0
    %117 = vmatpush.msra.mxu0 %v91
    %118 = vmatpush.msra.mxu0 %v87
    %119 = vmatpush.msra.mxu0 %v83
    %120 = vmatpush.msra.mxu0 %v79
    %121 = vmatpush.msra.mxu0 %v75
    %122 = vmatpush.msra.mxu0 %v71
    %123 = vmatpush.msra.mxu0 %v67
    %124 = vmatpush.msra.mxu0 %v63
    %125 = vmatmul.f32.gmra.mxu0 %v107
    %v126 = vpop.f32.mrf.mxu0
    %v127 = vadd.f32 %v97, %v126
    %128 = vdwg.mxu0
    %129 = vmatpush.msra.mxu0 0.0
    %130 = vmatpush.msra.mxu0 0.0
    %131 = vmatpush.msra.mxu0 0.0
    %132 = vmatpush.msra.mxu0 0.0
    %133 = vmatpush.msra.mxu0 0.0
    %134 = vmatpush.msra.mxu0 0.0
    %135 = vmatpush.msra.mxu0 0.0
    %136 = vmatpush.msra.mxu0 0.0
    %137 = vmatpush.msra.mxu0 %v92
    %138 = vmatpush.msra.mxu0 %v88
    %139 = vmatpush.msra.mxu0 %v84
    %140 = vmatpush.msra.mxu0 %v80
    %141 = vmatpush.msra.mxu0 %v76
    %142 = vmatpush.msra.mxu0 %v72
    %143 = vmatpush.msra.mxu0 %v68
    %144 = vmatpush.msra.mxu0 %v64
    %145 = vmatmul.f32.gmra.mxu0 %v107
    %v146 = vpop.f32.mrf.mxu0
    %v147 = vadd.f32 %v98, %v146
    %148 = vdwg.mxu0
    %149 = vmatpush.msra.mxu0 0.0
    %150 = vmatpush.msra.mxu0 0.0
    %151 = vmatpush.msra.mxu0 0.0
    %152 = vmatpush.msra.mxu0 0.0
    %153 = vmatpush.msra.mxu0 0.0
    %154 = vmatpush.msra.mxu0 0.0
    %155 = vmatpush.msra.mxu0 0.0
    %156 = vmatpush.msra.mxu0 0.0
    %157 = vmatpush.msra.mxu0 %v93
    %158 = vmatpush.msra.mxu0 %v89
    %159 = vmatpush.msra.mxu0 %v85
    %160 = vmatpush.msra.mxu0 %v81
    %161 = vmatpush.msra.mxu0 %v77
    %162 = vmatpush.msra.mxu0 %v73
    %163 = vmatpush.msra.mxu0 %v69
    %164 = vmatpush.msra.mxu0 %v65
    %165 = vmatmul.f32.gmra.mxu0 %v107
    %v166 = vpop.f32.mrf.mxu0
    %v167 = vadd.f32 %v99, %v166
    %168 = vdwg.mxu0
    %169 = vmatpush.msra.mxu0 0.0
    %170 = vmatpush.msra.mxu0 0.0
    %171 = vmatpush.msra.mxu0 0.0
    %172 = vmatpush.msra.mxu0 0.0
    %173 = vmatpush.msra.mxu0 0.0
    %174 = vmatpush.msra.mxu0 0.0
    %175 = vmatpush.msra.mxu0 0.0
    %176 = vmatpush.msra.mxu0 0.0
    %177 = vmatpush.msra.mxu0 %v94
    %178 = vmatpush.msra.mxu0 %v90
    %179 = vmatpush.msra.mxu0 %v86
    %180 = vmatpush.msra.mxu0 %v82
    %181 = vmatpush.msra.mxu0 %v78
    %182 = vmatpush.msra.mxu0 %v74
    %183 = vmatpush.msra.mxu0 %v70
    %184 = vmatpush.msra.mxu0 %v66
    %185 = vmatmul.f32.gmra.mxu0 %v107
    %v186 = vpop.f32.mrf.mxu0
    %v187 = vadd.f32 %v100, %v186
    %188 = vdwg.mxu0
    %v189 = vmax.f32 %v127, 0.0
    %v190 = vmax.f32 %v147, 0.0
    %v191 = vmax.f32 %v167, 0.0
    %v192 = vmax.f32 %v187, 0.0
    %v193 = vld [vmem:[%s5] sm:$0xff]
    %v194 = vld [vmem:[%s5 + $0x8] sm:$0xff]
    %v195 = vld [vmem:[%s5 + $0x10] sm:$0xff]
    %v196 = vld [vmem:[%s5 + $0x18] sm:$0xff]
    %v197 = vld [vmem:[%s5 + $0x20] sm:$0xff]
    %v198 = vld [vmem:[%s5 + $0x28] sm:$0xff]
    %v199 = vld [vmem:[%s5 + $0x30] sm:$0xff]
    %v200 = vld [vmem:[%s5 + $0x38] sm:$0xff]
    %v201 = vld [vmem:[%s5 + $0x40] sm:$0xff]
    %v202 = vld [vmem:[%s5 + $0x48] sm:$0xff]
    %v203 = vld [vmem:[%s5 + $0x50] sm:$0xff]
    %v204 = vld [vmem:[%s5 + $0x58] sm:$0xff]
    %v205 = vld [vmem:[%s5 + $0x60] sm:$0xff]
    %v206 = vld [vmem:[%s5 + $0x68] sm:$0xff]
    %v207 = vld [vmem:[%s5 + $0x70] sm:$0xff]
    %v208 = vld [vmem:[%s5 + $0x78] sm:$0xff]
    %v209 = vld [vmem:[%s5 + $0x80] sm:$0xff]
    %v210 = vld [vmem:[%s5 + $0x88] sm:$0xff]
    %v211 = vld [vmem:[%s5 + $0x90] sm:$0xff]
    %v212 = vld [vmem:[%s5 + $0x98] sm:$0xff]
    %v213 = vld [vmem:[%s5 + $0xa0] sm:$0xff]
    %v214 = vld [vmem:[%s5 + $0xa8] sm:$0xff]
    %v215 = vld [vmem:[%s5 + $0xb0] sm:$0xff]
    %v216 = vld [vmem:[%s5 + $0xb8] sm:$0xff]
    %v217 = vld [vmem:[%s5 + $0xc0] sm:$0xff]
    %v218 = vld [vmem:[%s5 + $0xc8] sm:$0xff]
    %v219 = vld [vmem:[%s5 + $0xd0] sm:$0xff]
    %v220 = vld [vmem:[%s5 + $0xd8] sm:$0xff]
    %v221 = vld [vmem:[%s5 + $0xe0] sm:$0xff]
    %v222 = vld [vmem:[%s5 + $0xe8] sm:$0xff]
    %v223 = vld [vmem:[%s5 + $0xf0] sm:$0xff]
    %v224 = vld [vmem:[%s5 + $0xf8] sm:$0xff]
    %v225 = vld [vmem:[%s5 + $0x100] sm:$0xff]
    %v226 = vld [vmem:[%s5 + $0x108] sm:$0xff]
    %v227 = vld [vmem:[%s5 + $0x110] sm:$0xff]
    %v228 = vld [vmem:[%s5 + $0x118] sm:$0xff]
    %v229 = vld [vmem:[%s5 + $0x120] sm:$0xff]
    %v230 = vld [vmem:[%s5 + $0x128] sm:$0xff]
    %v231 = vld [vmem:[%s5 + $0x130] sm:$0xff]
    %v232 = vld [vmem:[%s5 + $0x138] sm:$0xff]
    %v233 = vld [vmem:[%s5 + $0x140] sm:$0xff]
    %v234 = vld [vmem:[%s5 + $0x148] sm:$0xff]
    %v235 = vld [vmem:[%s5 + $0x150] sm:$0xff]
    %v236 = vld [vmem:[%s5 + $0x158] sm:$0xff]
    %v237 = vld [vmem:[%s5 + $0x160] sm:$0xff]
    %v238 = vld [vmem:[%s5 + $0x168] sm:$0xff]
    %v239 = vld [vmem:[%s5 + $0x170] sm:$0xff]
    %v240 = vld [vmem:[%s5 + $0x178] sm:$0xff]
    %v241 = vld [vmem:[%s5 + $0x180] sm:$0xff]
    %v242 = vld [vmem:[%s5 + $0x188] sm:$0xff]
    %v243 = vld [vmem:[%s5 + $0x190] sm:$0xff]
    %v244 = vld [vmem:[%s5 + $0x198] sm:$0xff]
    %v245 = vld [vmem:[%s5 + $0x1a0] sm:$0xff]
    %v246 = vld [vmem:[%s5 + $0x1a8] sm:$0xff]
    %v247 = vld [vmem:[%s5 + $0x1b0] sm:$0xff]
    %v248 = vld [vmem:[%s5 + $0x1b8] sm:$0xff]
    %v249 = vld [vmem:[%s5 + $0x1c0] sm:$0xff]
    %v250 = vld [vmem:[%s5 + $0x1c8] sm:$0xff]
    %v251 = vld [vmem:[%s5 + $0x1d0] sm:$0xff]
    %v252 = vld [vmem:[%s5 + $0x1d8] sm:$0xff]
    %v253 = vld [vmem:[%s5 + $0x1e0] sm:$0xff]
    %v254 = vld [vmem:[%s5 + $0x1e8] sm:$0xff]
    %v255 = vld [vmem:[%s5 + $0x1f0] sm:$0xff]
    %v256 = vld [vmem:[%s5 + $0x1f8] sm:$0xff]
    %v257 = vld [vmem:[%s6] sm:$0x1]
    %v259 = vperm.slane %v257, 0
    %261 = vmatpush.msra.mxu0 %v208
    %262 = vmatpush.msra.mxu0 %v207
    %263 = vmatpush.msra.mxu0 %v206
    %264 = vmatpush.msra.mxu0 %v205
    %265 = vmatpush.msra.mxu0 %v204
    %266 = vmatpush.msra.mxu0 %v203
    %267 = vmatpush.msra.mxu0 %v202
    %268 = vmatpush.msra.mxu0 %v201
    %269 = vmatpush.msra.mxu0 %v200
    %270 = vmatpush.msra.mxu0 %v199
    %271 = vmatpush.msra.mxu0 %v198
    %272 = vmatpush.msra.mxu0 %v197
    %273 = vmatpush.msra.mxu0 %v196
    %274 = vmatpush.msra.mxu0 %v195
    %275 = vmatpush.msra.mxu0 %v194
    %276 = vmatpush.msra.mxu0 %v193
    %277 = vmatmul.f32.gmra.mxu0 %v189
    %v278 = vpop.f32.mrf.mxu0
    %v279 = vadd.f32 %v259, %v278
    %280 = vdwg.mxu0
    %281 = vmatpush.msra.mxu0 %v224
    %282 = vmatpush.msra.mxu0 %v223
    %283 = vmatpush.msra.mxu0 %v222
    %284 = vmatpush.msra.mxu0 %v221
    %285 = vmatpush.msra.mxu0 %v220
    %286 = vmatpush.msra.mxu0 %v219
    %287 = vmatpush.msra.mxu0 %v218
    %288 = vmatpush.msra.mxu0 %v217
    %289 = vmatpush.msra.mxu0 %v216
    %290 = vmatpush.msra.mxu0 %v215
    %291 = vmatpush.msra.mxu0 %v214
    %292 = vmatpush.msra.mxu0 %v213
    %293 = vmatpush.msra.mxu0 %v212
    %294 = vmatpush.msra.mxu0 %v211
    %295 = vmatpush.msra.mxu0 %v210
    %296 = vmatpush.msra.mxu0 %v209
    %297 = vmatmul.f32.gmra.mxu0 %v190
    %v298 = vpop.f32.mrf.mxu0
    %v299 = vadd.f32 %v279, %v298
    %300 = vdwg.mxu0
    %301 = vmatpush.msra.mxu0 %v240
    %302 = vmatpush.msra.mxu0 %v239
    %303 = vmatpush.msra.mxu0 %v238
    %304 = vmatpush.msra.mxu0 %v237
    %305 = vmatpush.msra.mxu0 %v236
    %306 = vmatpush.msra.mxu0 %v235
    %307 = vmatpush.msra.mxu0 %v234
    %308 = vmatpush.msra.mxu0 %v233
    %309 = vmatpush.msra.mxu0 %v232
    %310 = vmatpush.msra.mxu0 %v231
    %311 = vmatpush.msra.mxu0 %v230
    %312 = vmatpush.msra.mxu0 %v229
    %313 = vmatpush.msra.mxu0 %v228
    %314 = vmatpush.msra.mxu0 %v227
    %315 = vmatpush.msra.mxu0 %v226
    %316 = vmatpush.msra.mxu0 %v225
    %317 = vmatmul.f32.gmra.mxu0 %v191
    %v318 = vpop.f32.mrf.mxu0
    %v319 = vadd.f32 %v299, %v318
    %320 = vdwg.mxu0
    %321 = vmatpush.msra.mxu0 %v256
    %322 = vmatpush.msra.mxu0 %v255
    %323 = vmatpush.msra.mxu0 %v254
    %324 = vmatpush.msra.mxu0 %v253
    %325 = vmatpush.msra.mxu0 %v252
    %326 = vmatpush.msra.mxu0 %v251
    %327 = vmatpush.msra.mxu0 %v250
    %328 = vmatpush.msra.mxu0 %v249
    %329 = vmatpush.msra.mxu0 %v248
    %330 = vmatpush.msra.mxu0 %v247
    %331 = vmatpush.msra.mxu0 %v246
    %332 = vmatpush.msra.mxu0 %v245
    %333 = vmatpush.msra.mxu0 %v244
    %334 = vmatpush.msra.mxu0 %v243
    %335 = vmatpush.msra.mxu0 %v242
    %336 = vmatpush.msra.mxu0 %v241
    %337 = vmatmul.f32.gmra.mxu0 %v192
    %v338 = vpop.f32.mrf.mxu0
    %v339 = vadd.f32 %v319, %v338
    %340 = vdwg.mxu0
    %vm341 = vcmask 48128
    %v342 = vsel %vm341, %v339, -inf
    %343 = vmax.xlane.f32.xlu0 %v342
    %v344 = vpop.xlane.xlu0 %343
    %v345 = vsub.f32 %v339, %v344
    %v346 = vmul.f32 %v345, 1.442695
    %v347 = vpow.pop %v346
    %v348 = vsel %vm341, %v347, 0.0
    %349 = vadd.xlane.f32.xlu0 %v348
    %v350 = vpop.xlane.xlu0 %349
    %v351 = vrcp.pop %v350
    %v352 = vmul.f32 %v350, %v351
    %v353 = vsub.f32 1.0, %v352
    %v354 = vmul.f32 %v351, %v353
    %v355 = vadd.f32 %v351, %v354
    %vm356 = vweird.f32 %v350
    %vm357 = vweird.f32 %v351
    %vm358 = vmor %vm356, %vm357
    %v359 = vsel %vm358, %v351, %v355
    %v360 = vand.u32 2147483647, %v350
    %vm361 = vcmp.eq.f32.partialorder %v360, 8.507059e+37
    %v362 = vand.u32 %v350, 2147483648
    %v363 = vor.u32 1.1754944e-38, %v362
    %v364 = vsel %vm361, %v363, %v359
    %v365 = vmul.f32 %v347, %v364
    %v366 = vlog2.pop %v350
    %v367 = vmul.f32 %v366, 0.6931472
    %v368 = vsub.f32 %v345, %v367
    %v369 = vcvt.f32.s32.to.zero.pseudo %v27
    %v370 = vlaneseq
    %v371 = vand.u32 %v370, 127
    %372 = vset.pattern.permute.xlu0 8
    %373 = vperm.xlu0 %372, %v369
    %v374 = vpop.permute.xlu0 %373
    %vm375 = vcmp.eq.s32.totalorder %v371, %v374
    %v376 = vsel %vm375, 1, 0
    %v377 = vcvt.s32.f32 %v376
    %v378 = vmul.f32 %v368, %v377
    %v379 = vsel %vm341, %v378, 0.0
    %380 = vadd.xlane.f32.xlu0 %v379
    %v381 = vpop.xlane.xlu0 %380
    %v382 = vmul.f32 %v365, %v368
    %v383 = vsel %vm341, %v382, 0.0
    %384 = vadd.xlane.f32.xlu0 %v383
    %v385 = vpop.xlane.xlu0 %384
    %v386 = vsub.f32 0.0, %v385
    %388 = vrot.lane.b32.xlu0 %v339, 1
    %v389 = vpop.permute.xlu0 %388
    %v391 = vsel %vm341, %v365, %v381
    %vm392 = vcmask 56320
    %v393 = vsel %vm392, %v391, %v389
    %vm394 = vcmask 64512
    %v395 = vsel %vm394, %v393, %v386
    %v396 = vsel %vm34, %v395, 0.0
    %vm397 = vcmask 130048
    %398 = vst.msk [vmem:[#allocation2] sm:$0xff] %vm397, %v396
    // Predicated region
    $region30: #{tpu_custom_call.1} parent=1 // pred_check
      _
    $region31: #{tpu_custom_call.1} parent=1 // pred_check_branch
      %400 = sbr.rel (0) target = $region33
    $region32: #{tpu_custom_call.1} parent=1 // pred_region
      %402 = vsyncadd [#allocation3], 0
      %s404 = sshll.u32 [#allocation2], 4
      %s405 = int_to_ptr.vmem [resolvable:$true] %s404
      %s406 = sshll.u32 %s7, 4
      %s407 = int_to_ptr.hbm [resolvable:$true] %s406
      %409 = dma.vmem_to_hbm [thread:$0]  %s405, 128, %s407, [#allocation3]
    $region33: #{tpu_custom_call.1} parent=1 // pred_fallthru
      _
    // Predicated region
    $region34: #{tpu_custom_call.1} parent=1 // pred_check
      _
    $region35: #{tpu_custom_call.1} parent=1 // pred_check_branch
      %411 = sbr.rel (0) target = $region37
    $region36: #{tpu_custom_call.1} parent=1 // pred_region
      %413 = dma.done [#allocation3], 128
    $region37: #{tpu_custom_call.1} parent=1 // pred_fallthru
      _
    %414 = vsyncpa [#allocation3], 1

</llo_original>
